<compile_context>
chip_gen: v7x
topology: tpu7x:2x2x1
jax: 0.10.0
libtpu: 0.0.40
codegen_flags: <defaults>
</compile_context>

<pallas_src>
import functools

import jax
import jax.numpy as jnp
from jax.experimental import pallas as pl
from jax.experimental.pallas import tpu as pltpu


# -----------------------------------------------------------------------------
# VMEM budgeting helpers
# -----------------------------------------------------------------------------

_DEFAULT_VMEM_CAP = 64 << 20   # v7x per-TensorCore VMEM; conservative elsewhere


def _vmem_capacity_bytes():
    """Physical VMEM per TensorCore (falls back to the smallest, v7x's 64 MiB)."""
    try:
        info = pltpu.get_tpu_info()
        for name in ("vmem_capacity_bytes", "vmem_size_bytes", "vmem_bytes"):
            cap = getattr(info, name, None)
            if cap:
                return int(cap)
    except Exception:
        pass
    return _DEFAULT_VMEM_CAP


def _vmem_limit_bytes(resident, cap):
    """Raise the scoped VMEM limit when needed (v5e's default is only 16 MiB)."""
    if resident <= (16 << 20):
        return None
    return int(min(resident + (4 << 20), cap - (8 << 20)))


# -----------------------------------------------------------------------------
# Kernels
# -----------------------------------------------------------------------------

def _se_fused_kernel(x_ref, w1_ref, b1_ref, w2_ref, b2_ref, o_ref, *,
                     spatial_axis, inv_s):
    # x_ref: (Bt, C, S) when spatial_axis == 2   (spatial on lanes)
    #        (Bt, S, C) when spatial_axis == 1   (channels on lanes)
    x = x_ref[...]
    # Squeeze in f32 without materializing an f32 copy of the whole block.
    y = jnp.sum(x, axis=spatial_axis, dtype=jnp.float32) * inv_s          # (Bt, C)
    # Excitation: fc1 -> relu -> fc2 -> sigmoid (tiny, off the critical path).
    h = jnp.dot(y, w1_ref[...], preferred_element_type=jnp.float32) + b1_ref[...]
    h = jnp.maximum(h, 0.0)                                               # (Bt, Cr)
    g = jax.nn.sigmoid(
        jnp.dot(h, w2_ref[...], preferred_element_type=jnp.float32) + b2_ref[...])
    # Scale in the native dtype (no whole-block f32 temporary).
    gate = jnp.expand_dims(g, spatial_axis).astype(x.dtype)
    o_ref[...] = x * gate


def _se_gate_kernel(x_ref, w1_ref, b1_ref, w2_ref, b2_ref, gate_ref, acc_ref, *,
                    spatial_axis, s_total, ts, inv_s):
    # Pass 1 of the two-pass fallback: accumulate per-channel f32 sums over
    # spatial tiles, then compute the gate once at the last tile.
    t = pl.program_id(1)

    @pl.when(t == 0)
    def _init():
        acc_ref[...] = jnp.zeros_like(acc_ref)

    x = x_ref[...]                                   # (1, C, Ts) or (1, Ts, C)
    if s_total % ts != 0:
        # Static branch: mask the padded tail of the last (partial) tile.
        pos = t * ts + jax.lax.broadcasted_iota(jnp.int32, x.shape, spatial_axis)
        x = jnp.where(pos < s_total, x, jnp.zeros_like(x))
    acc_ref[...] += jnp.sum(x, axis=spatial_axis, dtype=jnp.float32)      # (1, C)

    @pl.when(t == pl.num_programs(1) - 1)
    def _finalize():
        y = acc_ref[...] * inv_s
        h = jnp.maximum(
            jnp.dot(y, w1_ref[...], preferred_element_type=jnp.float32) + b1_ref[...],
            0.0)
        g = jax.nn.sigmoid(
            jnp.dot(h, w2_ref[...], preferred_element_type=jnp.float32) + b2_ref[...])
        gate_ref[...] = g.reshape(gate_ref.shape)


def _se_scale_kernel(x_ref, gate_ref, o_ref):
    # Pass 2 of the two-pass fallback: scale one spatial tile by the gate.
    x = x_ref[...]
    o_ref[...] = x * gate_ref[...].astype(x.dtype)


# -----------------------------------------------------------------------------
# Wrapper over the flattened (B, C, S) / (B, S, C) layout
# -----------------------------------------------------------------------------

def _se_block_flat(x_flat, w1, b1, w2, b2, *, spatial_axis, donate_x=False,
                   spatial_tile=None):
    """x_flat: (B, C, S) [spatial_axis=2] or (B, S, C) [spatial_axis=1]."""
    assert x_flat.ndim == 3 and spatial_axis in (1, 2)
    B = x_flat.shape[0]
    C, Cr = w1.shape
    S = x_flat.shape[spatial_axis]
    assert x_flat.shape[3 - spatial_axis] == C

    w1f = w1.astype(jnp.float32)
    w2f = w2.astype(jnp.float32)
    b1f = b1.reshape(1, Cr).astype(jnp.float32)
    b2f = b2.reshape(1, C).astype(jnp.float32)

    itemsize = x_flat.dtype.itemsize
    item_bytes = C * S * itemsize                     # one batch element (in or out)
    params_bytes = 4 * (2 * C * Cr + C + Cr)
    inv_s = float(1.0 / S)

    cap = _vmem_capacity_bytes()
    # Per-generation budget: ~48 MiB on v7x (64 MiB VMEM), ~96 MiB on v5e/v6e.
    budget = min((cap * 3) // 4, cap - (16 << 20))
    blk_budget = budget - params_bytes - (2 << 20)    # headroom for scratch/temps

    aliases = {0: 0} if donate_x else {}

    # ------------------------- single fused kernel --------------------------
    if spatial_tile is None and 4 * item_bytes <= blk_budget:
        # Fold Bt batch elements per grid step; keep >=4 steps when B allows.
        bt = max(1, min(B, blk_budget // (4 * item_bytes), max(1, B // 4)))
        while B % bt:                                 # prefer a divisor of B
            bt -= 1
        grid = (B // bt,)
        blk = (bt,) + x_flat.shape[1:]
        resident = 4 * bt * item_bytes + params_bytes + (2 << 20)

        cost = pl.CostEstimate(
            flops=int(2 * B * C * S + 4 * B * C * Cr),
            transcendentals=int(B * C),
            bytes_accessed=int(2 * B * C * S * itemsize + params_bytes),
        )
        kernel = functools.partial(_se_fused_kernel,
                                   spatial_axis=spatial_axis, inv_s=inv_s)
        return pl.pallas_call(
            kernel,
            out_shape=jax.ShapeDtypeStruct(x_flat.shape, x_flat.dtype),
            grid=grid,
            in_specs=[
                pl.BlockSpec(blk, lambda b: (b, 0, 0)),      # folded batch slab
                pl.BlockSpec((C, Cr), lambda b: (0, 0)),     # weights: constant
                pl.BlockSpec((1, Cr), lambda b: (0, 0)),     # index -> resident
                pl.BlockSpec((Cr, C), lambda b: (0, 0)),
                pl.BlockSpec((1, C), lambda b: (0, 0)),
            ],
            out_specs=pl.BlockSpec(blk, lambda b: (b, 0, 0)),
            compiler_params=pltpu.CompilerParams(
                dimension_semantics=("parallel",),
                vmem_limit_bytes=_vmem_limit_bytes(resident, cap),
            ),
            cost_estimate=cost,
            input_output_aliases=aliases,
        )(x_flat, w1f, b1f, w2f, b2f)

    # ----------------- two-pass fallback (blocks exceed budget) -------------
    row_bytes = C * itemsize
    align = 128 if spatial_axis == 2 else 8           # lane vs sublane alignment
    if spatial_tile is None:
        ts = max(1, blk_budget // (4 * row_bytes))
        ts = max(align, (ts // align) * align)
    else:
        ts = spatial_tile
    ts = min(ts, S)
    n_t = pl.cdiv(S, ts)

    if spatial_axis == 1:
        x_blk = (1, ts, C)
        x_idx = lambda b, t: (b, t, 0)
        gate_shape, gate_blk = (B, 1, C), (1, 1, C)
    else:
        x_blk = (1, C, ts)
        x_idx = lambda b, t: (b, 0, t)
        gate_shape, gate_blk = (B, C, 1), (1, C, 1)
    gate_idx = lambda b, t: (b, 0, 0)

    gate_kernel = functools.partial(
        _se_gate_kernel, spatial_axis=spatial_axis, s_total=S, ts=ts, inv_s=inv_s)
    gate = pl.pallas_call(
        gate_kernel,
        out_shape=jax.ShapeDtypeStruct(gate_shape, jnp.float32),
        grid=(B, n_t),
        in_specs=[
            pl.BlockSpec(x_blk, x_idx),
            pl.BlockSpec((C, Cr), lambda b, t: (0, 0)),
            pl.BlockSpec((1, Cr), lambda b, t: (0, 0)),
            pl.BlockSpec((Cr, C), lambda b, t: (0, 0)),
            pl.BlockSpec((1, C), lambda b, t: (0, 0)),
        ],
        out_specs=pl.BlockSpec(gate_blk, gate_idx),
        scratch_shapes=[pltpu.VMEM((1, C), jnp.float32)],
        compiler_params=pltpu.CompilerParams(
            dimension_semantics=("parallel", "arbitrary"),
            vmem_limit_bytes=_vmem_limit_bytes(
                2 * C * ts * itemsize + params_bytes + (2 << 20), cap),
        ),
    )(x_flat, w1f, b1f, w2f, b2f)

    return pl.pallas_call(
        _se_scale_kernel,
        out_shape=jax.ShapeDtypeStruct(x_flat.shape, x_flat.dtype),
        grid=(B, n_t),
        in_specs=[
            pl.BlockSpec(x_blk, x_idx),
            pl.BlockSpec(gate_blk, gate_idx),
        ],
        out_specs=pl.BlockSpec(x_blk, x_idx),
        compiler_params=pltpu.CompilerParams(
            dimension_semantics=("parallel", "arbitrary"),
            vmem_limit_bytes=_vmem_limit_bytes(
                4 * C * ts * itemsize + (2 << 20), cap),
        ),
        input_output_aliases=aliases,
    )(x_flat, gate)


# -----------------------------------------------------------------------------
# Public entry points
# -----------------------------------------------------------------------------

def se_block(x, w1, b1, w2, b2, *, donate_x=False, spatial_tile=None):
    """NCHW SEBlock forward (matches the PyTorch module).

    x : (B, C, H, W), any float dtype (bf16 recommended for bandwidth)
    w1: (C, Cr)  b1: (Cr,)   -- fc1 weight pre-transposed for y @ w1
    w2: (Cr, C)  b2: (C,)    -- fc2
    """
    B, C, H, W = x.shape
    S = H * W
    if (S % 128 != 0) and (C % 128 == 0):
        # Lane-sparse spatial dim but lane-dense channel dim: present channels
        # on the lane axis so stores are unmasked vst.  NOTE: the transposes
        # cost extra HBM passes -- callers that can should use se_block_nhwc.
        xt = jnp.transpose(x.reshape(B, C, S), (0, 2, 1))
        out = _se_block_flat(xt, w1, b1, w2, b2, spatial_axis=1,
                             donate_x=donate_x, spatial_tile=spatial_tile)
        return jnp.transpose(out, (0, 2, 1)).reshape(B, C, H, W)
    out = _se_block_flat(x.reshape(B, C, S), w1, b1, w2, b2, spatial_axis=2,
                         donate_x=donate_x, spatial_tile=spatial_tile)
    return out.reshape(B, C, H, W)


def se_block_nhwc(x, w1, b1, w2, b2, *, donate_x=False, spatial_tile=None):
    """Channels-last SEBlock forward: x is (B, H, W, C).  Preferred layout."""
    B, H, W, C = x.shape
    out = _se_block_flat(x.reshape(B, H * W, C), w1, b1, w2, b2, spatial_axis=1,
                         donate_x=donate_x, spatial_tile=spatial_tile)
    return out.reshape(B, H, W, C)


# -----------------------------------------------------------------------------
# Self-test
# -----------------------------------------------------------------------------

if __name__ == "__main__":
    key = jax.random.PRNGKey(0)
    reduction = 16

    def make_params(k, C, Cr):
        k1, k2, k3, k4 = jax.random.split(k, 4)
        w1 = jax.random.uniform(k1, (C, Cr), minval=-1.0, maxval=1.0,
                                dtype=jnp.float32) / jnp.sqrt(C)
        b1 = jax.random.uniform(k2, (Cr,), minval=-1.0, maxval=1.0,
                                dtype=jnp.float32) / jnp.sqrt(C)
        w2 = jax.random.uniform(k3, (Cr, C), minval=-1.0, maxval=1.0,
                                dtype=jnp.float32) / jnp.sqrt(Cr)
        b2 = jax.random.uniform(k4, (C,), minval=-1.0, maxval=1.0,
                                dtype=jnp.float32) / jnp.sqrt(Cr)
        return w1, b1, w2, b2

    def ref_nchw(x, w1, b1, w2, b2):
        xf = x.astype(jnp.float32)
        y = xf.mean(axis=(2, 3))
        g = jax.nn.sigmoid(jax.nn.relu(y @ w1 + b1) @ w2 + b2)
        return xf * g[:, :, None, None]

    def ref_nhwc(x, w1, b1, w2, b2):
        xf = x.astype(jnp.float32)
        y = xf.mean(axis=(1, 2))
        g = jax.nn.sigmoid(jax.nn.relu(y @ w1 + b1) @ w2 + b2)
        return xf * g[:, None, None, :]

    k_x1, k_p1, k_x3, k_p3, k_x4, k_x5, k_x6 = jax.random.split(key, 7)

    # ---- Test 1: NCHW float32, spatial on lanes (exact PyTorch semantics) ---
    B, C, H, W = 2, 32, 8, 8
    Cr = C // reduction
    x = jax.random.normal(k_x1, (B, C, H, W), dtype=jnp.float32)
    w1, b1, w2, b2 = make_params(k_p1, C, Cr)
    out = jax.block_until_ready(se_block(x, w1, b1, w2, b2))
    ref1 = ref_nchw(x, w1, b1, w2, b2)
    assert out.shape == (B, C, H, W) and out.dtype == jnp.float32
    assert jnp.allclose(out, ref1, atol=1e-5, rtol=1e-5)

    # ---- Test 2: bf16 bulk tensor (half the HBM traffic), donated input -----
    out_bf16 = jax.block_until_ready(
        se_block(x.astype(jnp.bfloat16), w1, b1, w2, b2, donate_x=True))
    assert out_bf16.dtype == jnp.bfloat16
    assert jnp.allclose(out_bf16.astype(jnp.float32), ref1, atol=5e-2, rtol=5e-2)

    # ---- Test 3: NHWC, C=128 lane-dense, batch folded (Bt=4, grid=(4,)) -----
    B3, H3, W3, C3 = 16, 4, 4, 128
    Cr3 = C3 // reduction
    x3 = jax.random.normal(k_x3, (B3, H3, W3, C3), dtype=jnp.float32)
    w1_3, b1_3, w2_3, b2_3 = make_params(k_p3, C3, Cr3)
    out3 = jax.block_until_ready(se_block_nhwc(x3, w1_3, b1_3, w2_3, b2_3))
    assert jnp.allclose(out3, ref_nhwc(x3, w1_3, b1_3, w2_3, b2_3),
                        atol=1e-5, rtol=1e-5)

    # ---- Test 4: NCHW with small HW but C=128 -> wrapper reroutes to the ----
    # ---- channels-on-lanes layout (lane-dense stores)                    ----
    x4 = jax.random.normal(k_x4, (2, C3, 4, 4), dtype=jnp.float32)
    out4 = jax.block_until_ready(se_block(x4, w1_3, b1_3, w2_3, b2_3))
    assert jnp.allclose(out4, ref_nchw(x4, w1_3, b1_3, w2_3, b2_3),
                        atol=1e-5, rtol=1e-5)

    # ---- Test 5: forced two-pass fallback (NHWC, partial last spatial tile) -
    x5 = jax.random.normal(k_x5, (2, 5, 5, C3), dtype=jnp.float32)
    out5 = jax.block_until_ready(
        se_block_nhwc(x5, w1_3, b1_3, w2_3, b2_3, spatial_tile=8))
    assert jnp.allclose(out5, ref_nhwc(x5, w1_3, b1_3, w2_3, b2_3),
                        atol=1e-5, rtol=1e-5)

    # ---- Test 6: forced two-pass fallback (NCHW, spatial on lanes) ----------
    x6 = jax.random.normal(k_x6, (2, C, 16, 16), dtype=jnp.float32)
    out6 = jax.block_until_ready(
        se_block(x6, w1, b1, w2, b2, spatial_tile=128))
    assert jnp.allclose(out6, ref_nchw(x6, w1, b1, w2, b2),
                        atol=1e-5, rtol=1e-5)

    print("KERNEL_OK")
</pallas_src>

<mosaic_0001>
module attributes {stable_mosaic.version = 11 : i64} {
  func.func @_se_fused_kernel(%arg0: i32, %arg1: memref<1x32x64xf32, #tpu.memory_space<vmem>>, %arg2: memref<32x2xf32, #tpu.memory_space<vmem>>, %arg3: memref<1x2xf32, #tpu.memory_space<vmem>>, %arg4: memref<2x32xf32, #tpu.memory_space<vmem>>, %arg5: memref<1x32xf32, #tpu.memory_space<vmem>>, %arg6: memref<1x32x64xf32, #tpu.memory_space<vmem>>) attributes {dimension_semantics = [#tpu.dimension_semantics<parallel>], iteration_bounds = array<i64: 2>, scalar_prefetch = 0 : i64, scratch_operands = 0 : i64, tpu.core_type = #tpu.core_type<tc>, window_params = [{transform_indices = @transform_0, window_bounds = array<i64: 1, 32, 64>}, {pipeline_mode = #tpu.pipeline_mode<synchronous>, transform_indices = @transform_1, window_bounds = array<i64: 32, 2>}, {pipeline_mode = #tpu.pipeline_mode<synchronous>, transform_indices = @transform_2, window_bounds = array<i64: 1, 2>}, {pipeline_mode = #tpu.pipeline_mode<synchronous>, transform_indices = @transform_3, window_bounds = array<i64: 2, 32>}, {pipeline_mode = #tpu.pipeline_mode<synchronous>, transform_indices = @transform_4, window_bounds = array<i64: 1, 32>}, {transform_indices = @transform_5, window_bounds = array<i64: 1, 32, 64>}]} {
    %c0 = arith.constant 0 : index
    %c0_0 = arith.constant 0 : index
    %c0_1 = arith.constant 0 : index
    %0 = vector.load %arg1[%c0, %c0_0, %c0_1] : memref<1x32x64xf32, #tpu.memory_space<vmem>>, vector<1x32x64xf32>
    %cst = arith.constant dense<0.000000e+00> : vector<1x32xf32>
    %1 = vector.multi_reduction <add>, %0, %cst [2] : vector<1x32x64xf32> to vector<1x32xf32>
    %cst_2 = arith.constant 1.562500e-02 : f32
    %2 = vector.broadcast %cst_2 : f32 to vector<1x32xf32>
    %3 = arith.mulf %1, %2 : vector<1x32xf32>
    %c0_3 = arith.constant 0 : index
    %c0_4 = arith.constant 0 : index
    %4 = vector.load %arg2[%c0_3, %c0_4] : memref<32x2xf32, #tpu.memory_space<vmem>>, vector<32x2xf32>
    %cst_5 = arith.constant dense<0.000000e+00> : vector<1x2xf32>
    %5 = tpu.matmul %3, %4, %cst_5 {dimension_numbers = #tpu.dot_dimension_numbers<[1], [0], [0], [1], [0, 0, 1, 1], [], []>} : vector<1x32xf32>, vector<32x2xf32>, vector<1x2xf32> -> vector<1x2xf32>
    %c0_6 = arith.constant 0 : index
    %c0_7 = arith.constant 0 : index
    %6 = vector.load %arg3[%c0_6, %c0_7] : memref<1x2xf32, #tpu.memory_space<vmem>>, vector<1x2xf32>
    %7 = arith.addf %5, %6 : vector<1x2xf32>
    %cst_8 = arith.constant 0.000000e+00 : f32
    %8 = vector.broadcast %cst_8 : f32 to vector<1x2xf32>
    %9 = arith.maximumf %7, %8 : vector<1x2xf32>
    %c0_9 = arith.constant 0 : index
    %c0_10 = arith.constant 0 : index
    %10 = vector.load %arg4[%c0_9, %c0_10] : memref<2x32xf32, #tpu.memory_space<vmem>>, vector<2x32xf32>
    %cst_11 = arith.constant dense<0.000000e+00> : vector<1x32xf32>
    %11 = tpu.matmul %9, %10, %cst_11 {dimension_numbers = #tpu.dot_dimension_numbers<[1], [0], [0], [1], [0, 0, 1, 1], [], []>} : vector<1x2xf32>, vector<2x32xf32>, vector<1x32xf32> -> vector<1x32xf32>
    %c0_12 = arith.constant 0 : index
    %c0_13 = arith.constant 0 : index
    %12 = vector.load %arg5[%c0_12, %c0_13] : memref<1x32xf32, #tpu.memory_space<vmem>>, vector<1x32xf32>
    %13 = arith.addf %11, %12 : vector<1x32xf32>
    %14 = arith.negf %13 : vector<1x32xf32>
    %15 = math.exp %14 : vector<1x32xf32>
    %cst_14 = arith.constant 1.000000e+00 : f32
    %16 = vector.broadcast %cst_14 : f32 to vector<1x32xf32>
    %17 = arith.addf %16, %15 : vector<1x32xf32>
    %18 = arith.divf %16, %17 : vector<1x32xf32>
    %19 = vector.shape_cast %18 : vector<1x32xf32> to vector<1x32x1xf32>
    %20 = vector.broadcast %19 : vector<1x32x1xf32> to vector<1x32x64xf32>
    %21 = arith.mulf %0, %20 : vector<1x32x64xf32>
    %c0_15 = arith.constant 0 : index
    %c0_16 = arith.constant 0 : index
    %c0_17 = arith.constant 0 : index
    %22 = vector.load %arg6[%c0_15, %c0_16, %c0_17] : memref<1x32x64xf32, #tpu.memory_space<vmem>>, vector<1x32x64xf32>
    tpu.vector_store %arg6[%c0_15, %c0_16, %c0_17], %21 {strides = array<i32>} : memref<1x32x64xf32, #tpu.memory_space<vmem>>, vector<1x32x64xf32>,
    return
  }
  func.func @transform_0(%arg0: i32) -> (i32, i32, i32) {
    %c0_i32 = arith.constant 0 : i32
    %c0_i32_0 = arith.constant 0 : i32
    %c0_i32_1 = arith.constant 0 : i32
    return %arg0, %c0_i32, %c0_i32_0 : i32, i32, i32
  }
  func.func @transform_1(%arg0: i32) -> (i32, i32) {
    %c0_i32 = arith.constant 0 : i32
    %c0_i32_0 = arith.constant 0 : i32
    %c0_i32_1 = arith.constant 0 : i32
    return %c0_i32, %c0_i32_0 : i32, i32
  }
  func.func @transform_2(%arg0: i32) -> (i32, i32) {
    %c0_i32 = arith.constant 0 : i32
    %c0_i32_0 = arith.constant 0 : i32
    %c0_i32_1 = arith.constant 0 : i32
    return %c0_i32, %c0_i32_0 : i32, i32
  }
  func.func @transform_3(%arg0: i32) -> (i32, i32) {
    %c0_i32 = arith.constant 0 : i32
    %c0_i32_0 = arith.constant 0 : i32
    %c0_i32_1 = arith.constant 0 : i32
    return %c0_i32, %c0_i32_0 : i32, i32
  }
  func.func @transform_4(%arg0: i32) -> (i32, i32) {
    %c0_i32 = arith.constant 0 : i32
    %c0_i32_0 = arith.constant 0 : i32
    %c0_i32_1 = arith.constant 0 : i32
    return %c0_i32, %c0_i32_0 : i32, i32
  }
  func.func @transform_5(%arg0: i32) -> (i32, i32, i32) {
    %c0_i32 = arith.constant 0 : i32
    %c0_i32_0 = arith.constant 0 : i32
    %c0_i32_1 = arith.constant 0 : i32
    return %arg0, %c0_i32, %c0_i32_0 : i32, i32, i32
  }
}

</mosaic_0001>

<llo_original>
// kernel: tpu_custom_call.1
$region0: #{tpu_custom_call.1}
  #allocation0 [shape = 'u32[]', space=smem, size = 0x4, offset = 0x4, fixed_abs, tag = 'smem constant byte address 0x4 - core index']
  #allocation1 [shape = 'u32[144,128]{1,0:T(1,128)}', space=vmem, size = 0x12000, scoped, tag = 'internal scratch']
  %s0 = inlined_call_operand.hbm [shape: f32[2,32,64], index: 0, kind: input, shape index: {}]
  %s1 = inlined_call_operand.vmem [shape: f32[32,2], index: 1, kind: input, shape index: {}]
  %s2 = inlined_call_operand.vmem [shape: f32[1,2], index: 2, kind: input, shape index: {}]
  %s3 = inlined_call_operand.vmem [shape: f32[2,32], index: 3, kind: input, shape index: {}]
  %s4 = inlined_call_operand.vmem [shape: f32[1,32], index: 4, kind: input, shape index: {}]
  %s5 = inlined_call_operand.hbm [shape: f32[2,32,64], index: 5, kind: output, shape index: {}]
  %s6 = sld [smem:[#allocation0]]
  $region57: #{tpu_custom_call.1} parent=0
    _
  %s8 = ssub.s32 1, %s6
  %s9 = scalar_select 0, %s8, %s6
  $region1: #{tpu_custom_call.1} parent=0
    #allocation2 [shape = 'u8[32768]{0}', space=vmem, size = 0x8000, scoped, tag = 'input window, operand 0']
    #allocation3 [shape = 's32[2]{0}', space=sflag, size = 0x8, scoped, tag = 'scoped memory for tpu_custom_call.1']
    #allocation4 [shape = 's32[2]{0}', space=sflag, size = 0x8, scoped, tag = 'scoped memory for tpu_custom_call.1']
    #allocation5 [shape = 'u8[32768]{0}', space=vmem, size = 0x8000, scoped, tag = 'output window, operand 0']
    %10 = vsyncpa [#allocation3], 0
    %s11 = scalar_lea.sflag [#allocation3], 1
    %12 = vsyncpa %s11, 0
    %13 = vsyncpa [#allocation4], 0
    %s14 = scalar_lea.sflag [#allocation4], 1
    %15 = vsyncpa %s14, 0
    loop: start=0, step=1, limit=4
    $region2: #{tpu_custom_call.1} parent=1 // loop_pre_header
      _
    $region3: #{tpu_custom_call.1} parent=1 // loop_header
      %s17 = sphi 0, %s21
      %p18 = scmp.ge.s32.totalorder %s17, 4
      %s27 = sphi 0, %s29
      %s30 = sphi 0, %s27
      %s31 = sphi 0, %s30
      %s47 = sphi 0, %s31
      %s51 = sphi 0, %s51
      %s53 = sphi 0, %s51
      %s54 = sphi 0, %s53
      %s68 = sphi 0, %s54
      %s72 = sphi 0, %s72
      %s74 = sphi 0, %s72
      %s75 = sphi 0, %s74
      %s89 = sphi 0, %s75
      %s93 = sphi 0, %s93
      %s95 = sphi 0, %s93
      %s96 = sphi 0, %s95
      %s110 = sphi 0, %s96
      %s114 = sphi 0, %s114
      %s116 = sphi 0, %s114
      %s117 = sphi 0, %s116
      %s131 = sphi 0, %s117
      %s137 = sphi 0, %s139
      %s140 = sphi 0, %s137
      %s141 = sphi 0, %s140
      %s157 = sphi 0, %s141
    $region4: #{tpu_custom_call.1} parent=1 // loop_header_branch
      %20 = sbr.rel (%p18) target = $region8
    $region5: #{tpu_custom_call.1} parent=1 // loop_body
      %s22 = ssub.s32 %s17, 1
      %s23 = ssub.s32 %s17, 2
      %s24 = sadd.s32 %s17, 1
      %s25 = ssub.s32 %s17, %s24
      %p26 = scmp.eq.s32.totalorder %s25, 0
      %s28 = sadd.s32 %s27, 1
      %s29 = scalar_select %p26, %s27, %s28
      %p32 = pneg %p26
      %p33 = scmp.eq.s32.totalorder %s17, 1
      %p34 = por %p32, %p33
      %p35 = scmp.ne.s32.totalorder %s27, %s30
      %p36 = scmp.eq.s32.totalorder %s17, 0
      %p37 = por %p35, %p36
      %p38 = scmp.ne.s32.totalorder %s27, %s30
      %p39 = scmp.eq.s32.totalorder %s22, 1
      %p40 = por %p38, %p39
      %p41 = scmp.ne.s32.totalorder %s30, %s31
      %p42 = scmp.eq.s32.totalorder %s22, 0
      %p43 = por %p41, %p42
      %p44 = scmp.ne.s32.totalorder %s30, %s31
      %p45 = scmp.eq.s32.totalorder %s23, 1
      %p46 = por %p44, %p45
      %p48 = scmp.ne.s32.totalorder %s31, %s47
      %p49 = scmp.eq.s32.totalorder %s23, 0
      %p50 = por %p48, %p49
      %s52 = sadd.s32 %s51, 1
      %p55 = scmp.eq.s32.totalorder %s17, 1
      %p56 = scmp.ne.s32.totalorder %s51, %s53
      %p57 = scmp.eq.s32.totalorder %s17, 0
      %p58 = por %p56, %p57
      %p59 = scmp.ne.s32.totalorder %s51, %s53
      %p60 = scmp.eq.s32.totalorder %s22, 1
      %p61 = por %p59, %p60
      %p62 = scmp.ne.s32.totalorder %s53, %s54
      %p63 = scmp.eq.s32.totalorder %s22, 0
      %p64 = por %p62, %p63
      %p65 = scmp.ne.s32.totalorder %s53, %s54
      %p66 = scmp.eq.s32.totalorder %s23, 1
      %p67 = por %p65, %p66
      %p69 = scmp.ne.s32.totalorder %s54, %s68
      %p70 = scmp.eq.s32.totalorder %s23, 0
      %p71 = por %p69, %p70
      %s73 = sadd.s32 %s72, 1
      %p76 = scmp.eq.s32.totalorder %s17, 1
      %p77 = scmp.ne.s32.totalorder %s72, %s74
      %p78 = scmp.eq.s32.totalorder %s17, 0
      %p79 = por %p77, %p78
      %p80 = scmp.ne.s32.totalorder %s72, %s74
      %p81 = scmp.eq.s32.totalorder %s22, 1
      %p82 = por %p80, %p81
      %p83 = scmp.ne.s32.totalorder %s74, %s75
      %p84 = scmp.eq.s32.totalorder %s22, 0
      %p85 = por %p83, %p84
      %p86 = scmp.ne.s32.totalorder %s74, %s75
      %p87 = scmp.eq.s32.totalorder %s23, 1
      %p88 = por %p86, %p87
      %p90 = scmp.ne.s32.totalorder %s75, %s89
      %p91 = scmp.eq.s32.totalorder %s23, 0
      %p92 = por %p90, %p91
      %s94 = sadd.s32 %s93, 1
      %p97 = scmp.eq.s32.totalorder %s17, 1
      %p98 = scmp.ne.s32.totalorder %s93, %s95
      %p99 = scmp.eq.s32.totalorder %s17, 0
      %p100 = por %p98, %p99
      %p101 = scmp.ne.s32.totalorder %s93, %s95
      %p102 = scmp.eq.s32.totalorder %s22, 1
      %p103 = por %p101, %p102
      %p104 = scmp.ne.s32.totalorder %s95, %s96
      %p105 = scmp.eq.s32.totalorder %s22, 0
      %p106 = por %p104, %p105
      %p107 = scmp.ne.s32.totalorder %s95, %s96
      %p108 = scmp.eq.s32.totalorder %s23, 1
      %p109 = por %p107, %p108
      %p111 = scmp.ne.s32.totalorder %s96, %s110
      %p112 = scmp.eq.s32.totalorder %s23, 0
      %p113 = por %p111, %p112
      %s115 = sadd.s32 %s114, 1
      %p118 = scmp.eq.s32.totalorder %s17, 1
      %p119 = scmp.ne.s32.totalorder %s114, %s116
      %p120 = scmp.eq.s32.totalorder %s17, 0
      %p121 = por %p119, %p120
      %p122 = scmp.ne.s32.totalorder %s114, %s116
      %p123 = scmp.eq.s32.totalorder %s22, 1
      %p124 = por %p122, %p123
      %p125 = scmp.ne.s32.totalorder %s116, %s117
      %p126 = scmp.eq.s32.totalorder %s22, 0
      %p127 = por %p125, %p126
      %p128 = scmp.ne.s32.totalorder %s116, %s117
      %p129 = scmp.eq.s32.totalorder %s23, 1
      %p130 = por %p128, %p129
      %p132 = scmp.ne.s32.totalorder %s117, %s131
      %p133 = scmp.eq.s32.totalorder %s23, 0
      %p134 = por %p132, %p133
      %s135 = ssub.s32 %s17, %s24
      %p136 = scmp.eq.s32.totalorder %s135, 0
      %s138 = sadd.s32 %s137, 1
      %s139 = scalar_select %p136, %s137, %s138
      %p142 = pneg %p136
      %p143 = scmp.eq.s32.totalorder %s17, 1
      %p144 = por %p142, %p143
      %p145 = scmp.ne.s32.totalorder %s137, %s140
      %p146 = scmp.eq.s32.totalorder %s17, 0
      %p147 = por %p145, %p146
      %p148 = scmp.ne.s32.totalorder %s137, %s140
      %p149 = scmp.eq.s32.totalorder %s22, 1
      %p150 = por %p148, %p149
      %p151 = scmp.ne.s32.totalorder %s140, %s141
      %p152 = scmp.eq.s32.totalorder %s22, 0
      %p153 = por %p151, %p152
      %p154 = scmp.ne.s32.totalorder %s140, %s141
      %p155 = scmp.eq.s32.totalorder %s23, 1
      %p156 = por %p154, %p155
      %p158 = scmp.ne.s32.totalorder %s141, %s157
      %p159 = scmp.eq.s32.totalorder %s23, 0
      %p160 = por %p158, %p159
      %p161 = scmp.le.s32.totalorder 1, %s17
      %p162 = scmp.lt.s32.totalorder %s17, 3
      %p163 = pnand %p161, %p162
      %p164 = pneg %p163
      // Predicated region
      $region9: #{tpu_custom_call.1} parent=5 // pred_check
        _
      $region10: #{tpu_custom_call.1} parent=5 // pred_check_branch
        %166 = sbr.rel (%p163) target = $region12
      $region11: #{tpu_custom_call.1} parent=5 // pred_region
        %s167 = ssub.s32 %s17, 1
        // Predicated region
        $region13: #{tpu_custom_call.1} parent=11 // pred_check
          %p168 = pneg %p64
        $region14: #{tpu_custom_call.1} parent=11 // pred_check_branch
          %170 = sbr.rel (%p168) target = $region16
        $region15: #{tpu_custom_call.1} parent=11 // pred_region
          _
        $region16: #{tpu_custom_call.1} parent=11 // pred_fallthru
          _
        // Predicated region
        $region17: #{tpu_custom_call.1} parent=11 // pred_check
          %p171 = pneg %p85
        $region18: #{tpu_custom_call.1} parent=11 // pred_check_branch
          %173 = sbr.rel (%p171) target = $region20
        $region19: #{tpu_custom_call.1} parent=11 // pred_region
          _
        $region20: #{tpu_custom_call.1} parent=11 // pred_fallthru
          _
        // Predicated region
        $region21: #{tpu_custom_call.1} parent=11 // pred_check
          %p174 = pneg %p106
        $region22: #{tpu_custom_call.1} parent=11 // pred_check_branch
          %176 = sbr.rel (%p174) target = $region24
        $region23: #{tpu_custom_call.1} parent=11 // pred_region
          _
        $region24: #{tpu_custom_call.1} parent=11 // pred_fallthru
          _
        // Predicated region
        $region25: #{tpu_custom_call.1} parent=11 // pred_check
          %p177 = pneg %p127
        $region26: #{tpu_custom_call.1} parent=11 // pred_check_branch
          %179 = sbr.rel (%p177) target = $region28
        $region27: #{tpu_custom_call.1} parent=11 // pred_region
          _
        $region28: #{tpu_custom_call.1} parent=11 // pred_fallthru
          _
      $region12: #{tpu_custom_call.1} parent=5 // pred_fallthru
        _
      %p180 = scmp.lt.s32.totalorder %s17, 2
      // Predicated region
      $region29: #{tpu_custom_call.1} parent=5 // pred_check
        %p181 = pneg %p180
      $region30: #{tpu_custom_call.1} parent=5 // pred_check_branch
        %183 = sbr.rel (%p181) target = $region32
      $region31: #{tpu_custom_call.1} parent=5 // pred_region
        // Predicated region
        $region33: #{tpu_custom_call.1} parent=31 // pred_check
          %p184 = pneg %p37
        $region34: #{tpu_custom_call.1} parent=31 // pred_check_branch
          %186 = sbr.rel (%p184) target = $region36
        $region35: #{tpu_custom_call.1} parent=31 // pred_region
          %s187 = sand.u32 %s27, 1
          %s188 = scalar_lea.sflag [#allocation3], %s187
          %s189 = sand.u32 %s27, 1
          %s190 = smul.addr %s189, 32
          %s191 = scalar_lea.vmem [#allocation2], %s190
          %s193 = ssub.s32 512, 512
          %194 = vsyncadd %s188, %s193
          %s195 = smul.addr %s17, 4
          %s196 = smul.addr %s195, 128
          %s197 = scalar_lea.hbm %s0, %s196
          %s198 = sshll.u32 %s191, 4
          %s199 = int_to_ptr.vmem [resolvable:$true] %s198
          %204 = dma.hbm_to_vmem [thread:$0]  %s197, 512, %s199, %s188, 128, 128, 8
        $region36: #{tpu_custom_call.1} parent=31 // pred_fallthru
          _
      $region32: #{tpu_custom_call.1} parent=5 // pred_fallthru
        _
      %p205 = scmp.le.s32.totalorder 1, %s17
      %p206 = scmp.lt.s32.totalorder %s17, 3
      %p207 = pnand %p205, %p206
      %p208 = pneg %p207
      // Predicated region
      $region37: #{tpu_custom_call.1} parent=5 // pred_check
        _
      $region38: #{tpu_custom_call.1} parent=5 // pred_check_branch
        %210 = sbr.rel (%p207) target = $region40
      $region39: #{tpu_custom_call.1} parent=5 // pred_region
        %s211 = ssub.s32 %s17, 1
        %s212 = sand.u32 %s30, 1
        %s213 = scalar_lea.sflag [#allocation3], %s212
        %s214 = sand.u32 %s30, 1
        %s215 = smul.addr %s214, 32
        %s216 = scalar_lea.vmem [#allocation2], %s215
        // Predicated region
        $region41: #{tpu_custom_call.1} parent=39 // pred_check
          %p217 = pneg %p43
        $region42: #{tpu_custom_call.1} parent=39 // pred_check_branch
          %219 = sbr.rel (%p217) target = $region44
        $region43: #{tpu_custom_call.1} parent=39 // pred_region
          %220 = dma.done %s213, 512
        $region44: #{tpu_custom_call.1} parent=39 // pred_fallthru
          _
        %s221 = sand.u32 %s30, 1
        %s222 = scalar_lea.sflag [#allocation3], %s221
        %s223 = sand.u32 %s30, 1
        %s224 = smul.addr %s223, 32
        %s225 = scalar_lea.vmem [#allocation2], %s224
        %p226 = pneg %p43
        %p227 = pneg %p40
        %p228 = pneg %p64
        %p229 = pneg %p61
        %p230 = pneg %p85
        %p231 = pneg %p82
        %p232 = pneg %p106
        %p233 = pneg %p103
        %p234 = pneg %p127
        %p235 = pneg %p124
        %p236 = pneg %p153
        %p237 = pneg %p150
        %s238 = sand.u32 %s140, 1
        %s239 = scalar_lea.sflag [#allocation4], %s238
        %s240 = sand.u32 %s140, 1
        %s241 = smul.addr %s240, 32
        %s242 = scalar_lea.vmem [#allocation5], %s241
        %v243 = vld [vmem:[%s216] sm:$0xff]
        %v244 = vld [vmem:[%s216 + $0x8] sm:$0xff]
        %v245 = vld [vmem:[%s216 + $0x10] sm:$0xff]
        %v246 = vld [vmem:[%s216 + $0x18] sm:$0xff]
        %vm247 = vcmask 523264
        %v248 = vsel %vm247, %v243, 0.0
        %249 = vadd.xlane.f32.xlu0 %v248
        %v250 = vpop.xlane.xlu0 %249
        %v251 = vsel %vm247, %v244, 0.0
        %252 = vadd.xlane.f32.xlu0 %v251
        %v253 = vpop.xlane.xlu0 %252
        %v254 = vsel %vm247, %v245, 0.0
        %255 = vadd.xlane.f32.xlu0 %v254
        %v256 = vpop.xlane.xlu0 %255
        %v257 = vsel %vm247, %v246, 0.0
        %258 = vadd.xlane.f32.xlu0 %v257
        %v259 = vpop.xlane.xlu0 %258
        %v260 = vmul.f32 %v250, 0.015625
        %v261 = vmul.f32 %v253, 0.015625
        %v262 = vmul.f32 %v256, 0.015625
        %v263 = vmul.f32 %v259, 0.015625
        %v264 = vld [vmem:[%s1] sm:$0xff]
        %v265 = vld [vmem:[%s1 + $0x8] sm:$0xff]
        %v266 = vld [vmem:[%s1 + $0x10] sm:$0xff]
        %v267 = vld [vmem:[%s1 + $0x18] sm:$0xff]
        %v268 = vld [vmem:[%s2] sm:$0x1]
        %v273 = vlaneseq
        %v274 = vand.u32 %v273, 127
        %v275 = vlaneseq
        %v276 = vshrl.u32 %v275, 7
        %v277 = vsub.s32 %v274, %v276
        %v278 = vrot.slane %v260, %v277
        %v279 = vadd.s32 %v274, 4294967288
        %v280 = vlaneseq
        %v281 = vshrl.u32 %v280, 7
        %v282 = vsub.s32 %v279, %v281
        %v283 = vrot.slane %v261, %v282
        %vm284 = vcmask 130112
        %v285 = vsel %vm284, %v283, %v278
        %v286 = vadd.s32 %v274, 4294967280
        %v287 = vlaneseq
        %v288 = vshrl.u32 %v287, 7
        %v289 = vsub.s32 %v286, %v288
        %v290 = vrot.slane %v262, %v289
        %vm291 = vcmask 195712
        %v292 = vsel %vm291, %v290, %v285
        %v293 = vadd.s32 %v274, 4294967272
        %v294 = vlaneseq
        %v295 = vshrl.u32 %v294, 7
        %v296 = vsub.s32 %v293, %v295
        %v297 = vrot.slane %v263, %v296
        %vm298 = vcmask 261312
        %v299 = vsel %vm298, %v297, %v292
        %vm300 = vcmask 261120
        %v301 = vsel %vm300, %v299, 0
        %303 = vmatprep.subr.mxu0 0.0
        %304 = vmatpush1.msra.mxu0 %v264
        %305 = vmatprep.subr.mxu0 0.0
        %306 = vmatpush1.msra.mxu0 %v265
        %307 = vmatprep.subr.mxu0 0.0
        %308 = vmatpush1.msra.mxu0 %v266
        %309 = vmatprep.subr.mxu0 0.0
        %310 = vmatpush1.msra.mxu0 %v267
        %311 = vmatprep.subr.mxu0 0.0
        %312 = vmatpush1.msra.mxu0 0.0
        %313 = vmatprep.subr.mxu0 0.0
        %314 = vmatpush1.msra.mxu0 0.0
        %315 = vmatprep.subr.mxu0 0.0
        %316 = vmatpush1.msra.mxu0 0.0
        %317 = vmatprep.subr.mxu0 0.0
        %318 = vmatpush1.msra.mxu0 0.0
        %319 = vmatprep.subr.mxu0 0.0
        %320 = vmatpush1.msra.mxu0 0.0
        %321 = vmatprep.subr.mxu0 0.0
        %322 = vmatpush1.msra.mxu0 0.0
        %323 = vmatprep.subr.mxu0 0.0
        %324 = vmatpush1.msra.mxu0 0.0
        %325 = vmatprep.subr.mxu0 0.0
        %326 = vmatpush1.msra.mxu0 0.0
        %327 = vmatprep.subr.mxu0 0.0
        %328 = vmatpush1.msra.mxu0 0.0
        %329 = vmatprep.subr.mxu0 0.0
        %330 = vmatpush1.msra.mxu0 0.0
        %331 = vmatprep.subr.mxu0 0.0
        %332 = vmatpush1.msra.mxu0 0.0
        %333 = vmatprep.subr.mxu0 0.0
        %334 = vmatpush1.msra.mxu0 0.0
        %335 = vmatprep.subr.mxu0 0.0
        %336 = vmatpush1.msra.mxu0 0.0
        %337 = vmatprep.subr.mxu0 0.0
        %338 = vmatpush1.msra.mxu0 0.0
        %339 = vmatprep.subr.mxu0 0.0
        %340 = vmatpush1.msra.mxu0 0.0
        %341 = vmatprep.subr.mxu0 0.0
        %342 = vmatpush1.msra.mxu0 0.0
        %343 = vmatprep.subr.mxu0 0.0
        %344 = vmatpush1.msra.mxu0 0.0
        %345 = vmatprep.subr.mxu0 0.0
        %346 = vmatpush1.msra.mxu0 0.0
        %347 = vmatprep.subr.mxu0 0.0
        %348 = vmatpush1.msra.mxu0 0.0
        %349 = vmatprep.subr.mxu0 0.0
        %350 = vmatpush1.msra.mxu0 0.0
        %351 = vmatprep.subr.mxu0 0.0
        %352 = vmatpush1.msra.mxu0 0.0
        %353 = vmatprep.subr.mxu0 0.0
        %354 = vmatpush1.msra.mxu0 0.0
        %355 = vmatprep.subr.mxu0 0.0
        %356 = vmatpush1.msra.mxu0 0.0
        %357 = vmatprep.subr.mxu0 0.0
        %358 = vmatpush1.msra.mxu0 0.0
        %359 = vmatprep.subr.mxu0 0.0
        %360 = vmatpush1.msra.mxu0 0.0
        %361 = vmatprep.subr.mxu0 0.0
        %362 = vmatpush1.msra.mxu0 0.0
        %363 = vmatprep.subr.mxu0 0.0
        %364 = vmatpush1.msra.mxu0 0.0
        %365 = vmatprep.subr.mxu0 0.0
        %366 = vmatpush1.msra.mxu0 0.0
        %367 = vmatprep.mubr.f32.mxu0 0.0
        %368 = vmatmul.mubr.f32.gmra.mrb[0].mxu0 %v301
        %v369 = vpop.f32.mrb[0].mxu0
        %v370 = vadd.f32 %v268, %v369
        %v371 = vpop.f32.mrb[0].mxu0
        %372 = vdwg.mxu0
        %v373 = vmax.f32 %v370, 0.0
        %v374 = vld [vmem:[%s3] sm:$0x3]
        %v375 = vld [vmem:[%s4] sm:$0x1]
        %vm376 = vcmask 15360
        %v378 = vsel %vm376, %v373, 0
        %vm380 = vcmask 1041408
        %v382 = vsel %vm380, %v374, 0
        %384 = vmatprep.subr.mxu0 0.0
        %385 = vmatpush1.msra.mxu0 %v382
        %386 = vmatprep.subr.mxu0 0.0
        %387 = vmatpush1.msra.mxu0 0.0
        %388 = vmatprep.subr.mxu0 0.0
        %389 = vmatpush1.msra.mxu0 0.0
        %390 = vmatprep.subr.mxu0 0.0
        %391 = vmatpush1.msra.mxu0 0.0
        %392 = vmatprep.subr.mxu0 0.0
        %393 = vmatpush1.msra.mxu0 0.0
        %394 = vmatprep.subr.mxu0 0.0
        %395 = vmatpush1.msra.mxu0 0.0
        %396 = vmatprep.subr.mxu0 0.0
        %397 = vmatpush1.msra.mxu0 0.0
        %398 = vmatprep.subr.mxu0 0.0
        %399 = vmatpush1.msra.mxu0 0.0
        %400 = vmatprep.subr.mxu0 0.0
        %401 = vmatpush1.msra.mxu0 0.0
        %402 = vmatprep.subr.mxu0 0.0
        %403 = vmatpush1.msra.mxu0 0.0
        %404 = vmatprep.subr.mxu0 0.0
        %405 = vmatpush1.msra.mxu0 0.0
        %406 = vmatprep.subr.mxu0 0.0
        %407 = vmatpush1.msra.mxu0 0.0
        %408 = vmatprep.subr.mxu0 0.0
        %409 = vmatpush1.msra.mxu0 0.0
        %410 = vmatprep.subr.mxu0 0.0
        %411 = vmatpush1.msra.mxu0 0.0
        %412 = vmatprep.subr.mxu0 0.0
        %413 = vmatpush1.msra.mxu0 0.0
        %414 = vmatprep.subr.mxu0 0.0
        %415 = vmatpush1.msra.mxu0 0.0
        %416 = vmatprep.subr.mxu0 0.0
        %417 = vmatpush1.msra.mxu0 0.0
        %418 = vmatprep.subr.mxu0 0.0
        %419 = vmatpush1.msra.mxu0 0.0
        %420 = vmatprep.subr.mxu0 0.0
        %421 = vmatpush1.msra.mxu0 0.0
        %422 = vmatprep.subr.mxu0 0.0
        %423 = vmatpush1.msra.mxu0 0.0
        %424 = vmatprep.subr.mxu0 0.0
        %425 = vmatpush1.msra.mxu0 0.0
        %426 = vmatprep.subr.mxu0 0.0
        %427 = vmatpush1.msra.mxu0 0.0
        %428 = vmatprep.subr.mxu0 0.0
        %429 = vmatpush1.msra.mxu0 0.0
        %430 = vmatprep.subr.mxu0 0.0
        %431 = vmatpush1.msra.mxu0 0.0
        %432 = vmatprep.subr.mxu0 0.0
        %433 = vmatpush1.msra.mxu0 0.0
        %434 = vmatprep.subr.mxu0 0.0
        %435 = vmatpush1.msra.mxu0 0.0
        %436 = vmatprep.subr.mxu0 0.0
        %437 = vmatpush1.msra.mxu0 0.0
        %438 = vmatprep.subr.mxu0 0.0
        %439 = vmatpush1.msra.mxu0 0.0
        %440 = vmatprep.subr.mxu0 0.0
        %441 = vmatpush1.msra.mxu0 0.0
        %442 = vmatprep.subr.mxu0 0.0
        %443 = vmatpush1.msra.mxu0 0.0
        %444 = vmatprep.subr.mxu0 0.0
        %445 = vmatpush1.msra.mxu0 0.0
        %446 = vmatprep.subr.mxu0 0.0
        %447 = vmatpush1.msra.mxu0 0.0
        %448 = vmatprep.mubr.f32.mxu0 0.0
        %449 = vmatmul.mubr.f32.gmra.mrb[0].mxu0 %v378
        %v450 = vpop.f32.mrb[0].mxu0
        %v451 = vadd.f32 %v375, %v450
        %v452 = vpop.f32.mrb[0].mxu0
        %453 = vdwg.mxu0
        %v454 = vxor.u32 %v451, 2147483648
        %v455 = vmul.f32 %v454, 1.442695
        %v456 = vpow.pop %v455
        %v457 = vadd.f32 %v456, 1.0
        %v458 = vrcp.pop %v457
        %v459 = vmul.f32 1.0, %v458
        %v460 = vlaneseq
        %v461 = vshrl.u32 %v460, 7
        %v462 = vsub.s32 0, %v461
        %v463 = vrot.slane %v459, %v462
        %465 = vbcast.lane.b32.xlu0 %v463, 256
        %v466 = vpop.permute.xlu0 %465
        %s468 = sor.u32 256, 8
        %469 = vbcast.lane.b32.xlu0 %v463, %s468
        %v470 = vpop.permute.xlu0 %469
        %s472 = sor.u32 256, 16
        %473 = vbcast.lane.b32.xlu0 %v463, %s472
        %v474 = vpop.permute.xlu0 %473
        %s476 = sor.u32 256, 24
        %477 = vbcast.lane.b32.xlu0 %v463, %s476
        %v478 = vpop.permute.xlu0 %477
        %v479 = vmul.f32 %v243, %v466
        %v480 = vmul.f32 %v244, %v470
        %v481 = vmul.f32 %v245, %v474
        %v482 = vmul.f32 %v246, %v478
        %483 = vst.msk [vmem:[%s242] sm:$0xff] %vm247, %v479
        %484 = vst.msk [vmem:[%s242 + $0x8] sm:$0xff] %vm247, %v480
        %485 = vst.msk [vmem:[%s242 + $0x10] sm:$0xff] %vm247, %v481
        %486 = vst.msk [vmem:[%s242 + $0x18] sm:$0xff] %vm247, %v482
        %s487 = sand.u32 %s140, 1
        %s488 = scalar_lea.sflag [#allocation4], %s487
        %s489 = sand.u32 %s140, 1
        %s490 = smul.addr %s489, 32
        %s491 = scalar_lea.vmem [#allocation5], %s490
        // Predicated region
        $region45: #{tpu_custom_call.1} parent=39 // pred_check
          %p492 = pneg %p150
        $region46: #{tpu_custom_call.1} parent=39 // pred_check_branch
          %494 = sbr.rel (%p492) target = $region48
        $region47: #{tpu_custom_call.1} parent=39 // pred_region
          %s496 = ssub.s32 512, 512
          %497 = vsyncadd %s488, %s496
          %s498 = smul.addr %s22, 4
          %s499 = smul.addr %s498, 128
          %s500 = scalar_lea.hbm %s5, %s499
          %s501 = sshll.u32 %s491, 4
          %s502 = int_to_ptr.vmem [resolvable:$true] %s501
          %507 = dma.vmem_to_hbm [thread:$0]  %s502, 512, %s500, %s488, 128, 128, 8
        $region48: #{tpu_custom_call.1} parent=39 // pred_fallthru
          _
      $region40: #{tpu_custom_call.1} parent=5 // pred_fallthru
        _
      %p508 = scmp.le.s32.totalorder 2, %s17
      // Predicated region
      $region49: #{tpu_custom_call.1} parent=5 // pred_check
        %p509 = pneg %p508
      $region50: #{tpu_custom_call.1} parent=5 // pred_check_branch
        %511 = sbr.rel (%p509) target = $region52
      $region51: #{tpu_custom_call.1} parent=5 // pred_region
        %s512 = ssub.s32 %s17, 2
        // Predicated region
        $region53: #{tpu_custom_call.1} parent=51 // pred_check
          %p513 = pneg %p156
        $region54: #{tpu_custom_call.1} parent=51 // pred_check_branch
          %515 = sbr.rel (%p513) target = $region56
        $region55: #{tpu_custom_call.1} parent=51 // pred_region
          %s516 = sand.u32 %s141, 1
          %s517 = scalar_lea.sflag [#allocation4], %s516
          %s518 = sand.u32 %s141, 1
          %s519 = smul.addr %s518, 32
          %s520 = scalar_lea.vmem [#allocation5], %s519
          %521 = dma.done %s517, 512
        $region56: #{tpu_custom_call.1} parent=51 // pred_fallthru
          _
      $region52: #{tpu_custom_call.1} parent=5 // pred_fallthru
        _
    $region6: #{tpu_custom_call.1} parent=1 // loop_footer
      %s21 = sadd.s32 1, %s17
    $region7: #{tpu_custom_call.1} parent=1 // loop_footer_branch
      %16 = sbr.rel target = $region3
    $region8: #{tpu_custom_call.1} parent=1 // loop_exit
      _
    %522 = vsyncpa [#allocation3], 1
    %s523 = scalar_lea.sflag [#allocation3], 1
    %524 = vsyncpa %s523, 1
    %525 = vsyncpa [#allocation4], 1
    %s526 = scalar_lea.sflag [#allocation4], 1
    %527 = vsyncpa %s526, 1

</llo_original>
